<compile_context>
chip_gen: v5e
topology: v5e:2x2
jax: 0.10.0
libtpu: 0.0.40
codegen_flags: <defaults>
</compile_context>

<pallas_src>
import functools

import jax
import jax.numpy as jnp
from jax.experimental import pallas as pl
from jax.experimental.pallas import tpu as pltpu

MIN_WEIGHT = 1e-5
EPS_NOISE = 1e-5
_NEG_LARGE = -1e30  # finite "-inf" for masked softmax / dead-lane exp


def _round_up(n, m):
    return ((n + m - 1) // m) * m


def make_mdnn_kernel(n_hidden, n_gaussians, dg, tile_b, batch, compute_dtype):
    """Build the fused MDNN kernel.

    Kernel refs: (x, w0, b0, ..., w{n-1}, b{n-1}, w_head, b_head,
                  slab_out, diag_sum_out)
      w_head   : (h_last, HEAD_PAD) packed [pi | mu | diag | lower | zero-pad]
      slab_out : (TILE_B, HEAD_PAD) f32, lane-dense, single unmasked store.
      diag_sum : (8, HEAD_PAD) per-tile lane-sums of exp(diag) over valid rows
                 (broadcast to 8 sublanes so the store stays (8,128)-aligned).
    """
    G = n_gaussians

    def kernel(*refs):
        x_ref = refs[0]
        slab_ref = refs[-2]
        dsum_ref = refs[-1]
        wb = refs[1:-2]

        # ---- hidden trunk: (Linear -> Tanh) * n_hidden, f32 MXU accumulation ----
        h = x_ref[...]
        for l in range(n_hidden):
            w = wb[2 * l][...]
            b = wb[2 * l + 1][...]
            h = jnp.tanh(
                jnp.dot(h.astype(compute_dtype), w,
                        preferred_element_type=jnp.float32) + b)

        # ---- single fused head matmul -> lane-dense (TILE_B, HEAD_PAD) slab ----
        wh = wb[2 * n_hidden][...]
        bh = wb[2 * n_hidden + 1][...]
        z = jnp.dot(h.astype(compute_dtype), wh,
                    preferred_element_type=jnp.float32) + bh

        col = jax.lax.broadcasted_iota(jnp.int32, z.shape, 1)
        is_pi = col < G                                  # mixture-weight lanes
        is_ld = (col >= G + dg) & (col < G + 2 * dg)     # covariance-diag lanes

        # pi head: masked softmax over the first G lanes.
        zp = jnp.where(is_pi, z, _NEG_LARGE)
        m = jnp.max(zp, axis=-1, keepdims=True)

        # ONE fused EUP pass: exp of (shifted pi lanes | raw diag lanes | -LARGE).
        # Dead lanes (mu / lower / pad) become exp(-1e30) == 0, i.e. finite.
        e = jnp.exp(jnp.where(is_pi, z - m, jnp.where(is_ld, z, _NEG_LARGE)))

        e_pi = jnp.where(is_pi, e, 0.0)
        s = jnp.sum(e_pi, axis=-1, keepdims=True)
        w_pi = e_pi / s                                  # exact divide (torch parity)
        w_pi = jnp.clip(w_pi, MIN_WEIGHT, 1.0)
        w_pi = jnp.where(is_pi, w_pi, 0.0)               # drop clamp on non-pi lanes
        w_pi = w_pi / jnp.sum(w_pi, axis=-1, keepdims=True)   # exact final renorm

        # fused slab: [weights | mu | exp(diag) | lower | zero pad], one store.
        slab_ref[...] = jnp.where(is_pi, w_pi, jnp.where(is_ld, e, z))

        # Per-tile lane-sum of exp(diag) over *valid* (un-padded) rows, for
        # eps = EPS_NOISE * mean(L_d) in the wrapper without re-reading the slab.
        row = (pl.program_id(0) * tile_b
               + jax.lax.broadcasted_iota(jnp.int32, z.shape, 0))
        valid = row < batch
        colsum = jnp.sum(jnp.where(is_ld & valid, e, 0.0), axis=0, keepdims=True)
        dsum_ref[...] = jnp.broadcast_to(colsum, dsum_ref.shape)

    return kernel


def mdnn_forward(x, params, noise_key, *, output_dim, n_gaussians, L_size,
                 use_bf16_matmul=False):
    """Pallas equivalent of MDNN.forward. Returns (weights, mu, L_d, L)."""
    x = jnp.asarray(x, jnp.float32)
    B, input_dim = x.shape
    G = n_gaussians
    DG = output_dim * n_gaussians
    LG = L_size * n_gaussians
    head_width = G + 2 * DG + LG
    head_pad = max(128, _round_up(head_width, 128))

    compute_dtype = jnp.bfloat16 if use_bf16_matmul else jnp.float32

    # ---- pack the four head projections into one lane-dense weight / bias ----
    head_ws = [params["wpi"], params["wmu"], params["wd"]]
    head_bs = [params["bpi"], params["bmu"], params["bd"]]
    if LG > 0:
        head_ws.append(params["wl"])
        head_bs.append(params["bl"])
    wh = jnp.concatenate(head_ws, axis=1)
    bh = jnp.concatenate(head_bs, axis=1)
    pad = head_pad - head_width
    if pad > 0:
        wh = jnp.pad(wh, ((0, 0), (0, pad)))
        bh = jnp.pad(bh, ((0, 0), (0, pad)))

    # ---- trunk params (compute-dtype weights, f32 biases) ----
    trunk = []
    n_hidden = 0
    while f"w{n_hidden}" in params:
        trunk.append(params[f"w{n_hidden}"].astype(compute_dtype))
        trunk.append(params[f"b{n_hidden}"].astype(jnp.float32))
        n_hidden += 1
    wh = wh.astype(compute_dtype)
    bh = bh.astype(jnp.float32)

    # Pre-cast x in the wrapper (halves the x HBM read when bf16 matmul is on).
    x = x.astype(compute_dtype)

    # ---- tile selection: big tiles to amortize per-grid-step overhead, but
    # keep >= 2 grid steps when the batch allows it (v7x has 2 TensorCores and
    # the "parallel" batch axis is the only thing sharding them). ----
    DESIRED_TILE = 1024
    b8 = _round_up(max(B, 1), 8)
    two_step_cap = _round_up((b8 + 1) // 2, 8) if b8 > 8 else 8
    TILE_B = min(DESIRED_TILE, two_step_cap)
    B_pad = _round_up(b8, TILE_B)
    if B_pad != B:
        x = jnp.pad(x, ((0, B_pad - B), (0, 0)))
    num_tiles = B_pad // TILE_B
    grid = (num_tiles,)

    operands = [x] + trunk + [wh, bh]

    def resident_spec(a):
        # Constant index map -> block stays resident in VMEM across grid steps.
        return pl.BlockSpec(a.shape, lambda i: (0, 0))

    in_specs = ([pl.BlockSpec((TILE_B, input_dim), lambda i: (i, 0))]
                + [resident_spec(a) for a in operands[1:]])

    out_specs = [
        pl.BlockSpec((TILE_B, head_pad), lambda i: (i, 0)),   # fused slab
        pl.BlockSpec((8, head_pad), lambda i: (i, 0)),        # per-tile diag sums
    ]
    out_shape = (
        jax.ShapeDtypeStruct((B_pad, head_pad), jnp.float32),
        jax.ShapeDtypeStruct((num_tiles * 8, head_pad), jnp.float32),
    )

    slab, dsum = pl.pallas_call(
        make_mdnn_kernel(n_hidden, G, DG, TILE_B, B, compute_dtype),
        grid=grid,
        in_specs=in_specs,
        out_specs=out_specs,
        out_shape=out_shape,
        compiler_params=pltpu.CompilerParams(
            dimension_semantics=("parallel",),
            vmem_limit_bytes=32 * 1024 * 1024),
    )(*operands)

    # ---- glue (kept inside the same jit so XLA fuses the slab reads) ----
    slab = slab[:B]
    weights = slab[:, :G]
    mu = slab[:, G:G + DG].reshape(B, output_dim, n_gaussians)
    L_d = slab[:, G + DG:G + 2 * DG].reshape(B, output_dim, n_gaussians)

    # eps = EPS_NOISE * L_d.mean()  (whole-batch mean, torch semantics),
    # computed from the per-tile kernel sums instead of re-reading (B, DG).
    ld_total = jnp.sum(dsum) / 8.0      # each tile's sums were broadcast to 8 rows
    eps = EPS_NOISE * ld_total / (B * DG)

    # L_d = L_d + rand_like(L_d).detach() * eps   (uniform [0,1) noise in JAX)
    noise = jax.random.uniform(noise_key, L_d.shape, dtype=jnp.float32)
    L_d = L_d + noise * eps

    L = None
    if LG > 0:
        L = slab[:, G + 2 * DG:G + 2 * DG + LG].reshape(B, L_size, n_gaussians)
    return weights, mu, L_d, L


def mdnn_reference(x, params, output_dim, n_gaussians, L_size):
    """Pure-JAX reference of the deterministic part of MDNN.forward."""
    h = jnp.asarray(x, jnp.float32)
    l = 0
    while f"w{l}" in params:
        h = jnp.tanh(h @ params[f"w{l}"] + params[f"b{l}"])
        l += 1
    w = jax.nn.softmax(h @ params["wpi"] + params["bpi"], axis=-1)
    w = jnp.clip(w, MIN_WEIGHT, 1.0)
    w = w / jnp.sum(w, axis=-1, keepdims=True)
    mu = (h @ params["wmu"] + params["bmu"]).reshape(-1, output_dim, n_gaussians)
    L_d = jnp.exp(h @ params["wd"] + params["bd"]).reshape(-1, output_dim, n_gaussians)
    L = None
    if L_size > 0:
        L = (h @ params["wl"] + params["bl"]).reshape(-1, L_size, n_gaussians)
    return w, mu, L_d, L


def init_mdnn_params(key, input_dim, hidden_layers, output_dim, n_gaussians, L_size):
    """Deterministic init mimicking nn.Linear default (U(-1/sqrt(fan_in), +))."""
    def linear(k, fan_in, fan_out):
        kw, kb = jax.random.split(k)
        bound = 1.0 / (float(fan_in) ** 0.5)
        w = jax.random.uniform(kw, (fan_in, fan_out), jnp.float32, -bound, bound)
        b = jax.random.uniform(kb, (1, fan_out), jnp.float32, -bound, bound)
        return w, b

    keys = jax.random.split(key, len(hidden_layers) + 4)
    params = {}
    last = input_dim
    for l, hsz in enumerate(hidden_layers):
        params[f"w{l}"], params[f"b{l}"] = linear(keys[l], last, hsz)
        last = hsz
    k = len(hidden_layers)
    params["wpi"], params["bpi"] = linear(keys[k], last, n_gaussians)
    params["wmu"], params["bmu"] = linear(keys[k + 1], last, output_dim * n_gaussians)
    params["wd"], params["bd"] = linear(keys[k + 2], last, output_dim * n_gaussians)
    if L_size > 0:
        params["wl"], params["bl"] = linear(keys[k + 3], last, L_size * n_gaussians)
    return params


def _check_outputs(weights, mu, L_d, L, batch, output_dim, n_gaussians, L_size):
    assert weights.shape == (batch, n_gaussians)
    assert mu.shape == (batch, output_dim, n_gaussians)
    assert L_d.shape == (batch, output_dim, n_gaussians)
    assert L.shape == (batch, L_size, n_gaussians)
    assert bool(jnp.isfinite(weights).all())
    assert bool(jnp.isfinite(mu).all())
    assert bool(jnp.isfinite(L_d).all())
    assert bool(jnp.isfinite(L).all())
    assert bool(jnp.allclose(jnp.sum(weights, axis=1), 1.0, atol=1e-5))
    assert bool((weights >= MIN_WEIGHT * 0.5).all())
    assert bool((L_d > 0).all())


if __name__ == "__main__":
    # Small MDNN config: input_dim=16, hidden_layers=[32, 32], output_dim=4,
    # n_gaussians=8, full_covariance=True -> L_size = 4*3/2 = 6.
    batch = 8
    input_dim = 16
    hidden_layers = (32, 32)
    output_dim = 4
    n_gaussians = 8
    L_size = (output_dim * (output_dim - 1)) // 2

    key = jax.random.PRNGKey(0)
    k_params, k_x, k_noise, k_x2 = jax.random.split(key, 4)

    params = init_mdnn_params(k_params, input_dim, hidden_layers,
                              output_dim, n_gaussians, L_size)

    fwd = jax.jit(functools.partial(
        mdnn_forward, output_dim=output_dim, n_gaussians=n_gaussians,
        L_size=L_size))

    # ---- run 1: tiny batch (single tile) + reference comparison ----
    x = jax.random.normal(k_x, (batch, input_dim), dtype=jnp.float32)
    weights, mu, L_d, L = fwd(x, params, k_noise)
    jax.block_until_ready((weights, mu, L_d, L))
    _check_outputs(weights, mu, L_d, L, batch, output_dim, n_gaussians, L_size)

    w_r, mu_r, ld_r, l_r = mdnn_reference(x, params, output_dim, n_gaussians, L_size)
    assert bool(jnp.allclose(weights, w_r, atol=1e-4, rtol=1e-4))
    assert bool(jnp.allclose(mu, mu_r, atol=1e-4, rtol=1e-4))
    assert bool(jnp.allclose(L, l_r, atol=1e-4, rtol=1e-4))
    # L_d differs only by the tiny detached noise term (<= EPS_NOISE * mean).
    assert bool(jnp.allclose(L_d, ld_r, atol=1e-3, rtol=1e-3))

    # ---- run 2: larger, non-multiple-of-8 batch -> exercises padding, the
    # row-validity mask in the per-tile diag sums, and the >=2-step grid ----
    batch2 = 300
    x2 = jax.random.normal(k_x2, (batch2, input_dim), dtype=jnp.float32)
    w2, mu2, ld2, l2 = fwd(x2, params, k_noise)
    jax.block_until_ready((w2, mu2, ld2, l2))
    _check_outputs(w2, mu2, ld2, l2, batch2, output_dim, n_gaussians, L_size)

    print("KERNEL_OK")
</pallas_src>

<mosaic_0001>
module attributes {stable_mosaic.version = 11 : i64} {
  func.func @kernel(%arg0: i32, %arg1: memref<8x16xf32, #tpu.memory_space<vmem>>, %arg2: memref<16x32xf32, #tpu.memory_space<vmem>>, %arg3: memref<1x32xf32, #tpu.memory_space<vmem>>, %arg4: memref<32x32xf32, #tpu.memory_space<vmem>>, %arg5: memref<1x32xf32, #tpu.memory_space<vmem>>, %arg6: memref<32x128xf32, #tpu.memory_space<vmem>>, %arg7: memref<1x128xf32, #tpu.memory_space<vmem>>, %arg8: memref<8x128xf32, #tpu.memory_space<vmem>>, %arg9: memref<8x128xf32, #tpu.memory_space<vmem>>) attributes {dimension_semantics = [#tpu.dimension_semantics<parallel>], iteration_bounds = array<i64: 1>, scalar_prefetch = 0 : i64, scratch_operands = 0 : i64, tpu.core_type = #tpu.core_type<tc>, window_params = [{transform_indices = @transform_0, window_bounds = array<i64: 8, 16>}, {pipeline_mode = #tpu.pipeline_mode<synchronous>, transform_indices = @transform_1, window_bounds = array<i64: 16, 32>}, {pipeline_mode = #tpu.pipeline_mode<synchronous>, transform_indices = @transform_2, window_bounds = array<i64: 1, 32>}, {pipeline_mode = #tpu.pipeline_mode<synchronous>, transform_indices = @transform_3, window_bounds = array<i64: 32, 32>}, {pipeline_mode = #tpu.pipeline_mode<synchronous>, transform_indices = @transform_4, window_bounds = array<i64: 1, 32>}, {pipeline_mode = #tpu.pipeline_mode<synchronous>, transform_indices = @transform_5, window_bounds = array<i64: 32, 128>}, {pipeline_mode = #tpu.pipeline_mode<synchronous>, transform_indices = @transform_6, window_bounds = array<i64: 1, 128>}, {transform_indices = @transform_7, window_bounds = array<i64: 8, 128>}, {transform_indices = @transform_8, window_bounds = array<i64: 8, 128>}]} {
    %c0 = arith.constant 0 : index
    %c0_0 = arith.constant 0 : index
    %0 = vector.load %arg1[%c0, %c0_0] : memref<8x16xf32, #tpu.memory_space<vmem>>, vector<8x16xf32>
    %c0_1 = arith.constant 0 : index
    %c0_2 = arith.constant 0 : index
    %1 = vector.load %arg2[%c0_1, %c0_2] : memref<16x32xf32, #tpu.memory_space<vmem>>, vector<16x32xf32>
    %c0_3 = arith.constant 0 : index
    %c0_4 = arith.constant 0 : index
    %2 = vector.load %arg3[%c0_3, %c0_4] : memref<1x32xf32, #tpu.memory_space<vmem>>, vector<1x32xf32>
    %cst = arith.constant dense<0.000000e+00> : vector<8x32xf32>
    %3 = tpu.matmul %0, %1, %cst {dimension_numbers = #tpu.dot_dimension_numbers<[1], [0], [0], [1], [0, 0, 1, 1], [], []>} : vector<8x16xf32>, vector<16x32xf32>, vector<8x32xf32> -> vector<8x32xf32>
    %4 = vector.broadcast %2 : vector<1x32xf32> to vector<8x32xf32>
    %5 = arith.addf %3, %4 : vector<8x32xf32>
    %6 = math.tanh %5 : vector<8x32xf32>
    %c0_5 = arith.constant 0 : index
    %c0_6 = arith.constant 0 : index
    %7 = vector.load %arg4[%c0_5, %c0_6] : memref<32x32xf32, #tpu.memory_space<vmem>>, vector<32x32xf32>
    %c0_7 = arith.constant 0 : index
    %c0_8 = arith.constant 0 : index
    %8 = vector.load %arg5[%c0_7, %c0_8] : memref<1x32xf32, #tpu.memory_space<vmem>>, vector<1x32xf32>
    %cst_9 = arith.constant dense<0.000000e+00> : vector<8x32xf32>
    %9 = tpu.matmul %6, %7, %cst_9 {dimension_numbers = #tpu.dot_dimension_numbers<[1], [0], [0], [1], [0, 0, 1, 1], [], []>} : vector<8x32xf32>, vector<32x32xf32>, vector<8x32xf32> -> vector<8x32xf32>
    %10 = vector.broadcast %8 : vector<1x32xf32> to vector<8x32xf32>
    %11 = arith.addf %9, %10 : vector<8x32xf32>
    %12 = math.tanh %11 : vector<8x32xf32>
    %c0_10 = arith.constant 0 : index
    %c0_11 = arith.constant 0 : index
    %13 = vector.load %arg6[%c0_10, %c0_11] : memref<32x128xf32, #tpu.memory_space<vmem>>, vector<32x128xf32>
    %c0_12 = arith.constant 0 : index
    %c0_13 = arith.constant 0 : index
    %14 = vector.load %arg7[%c0_12, %c0_13] : memref<1x128xf32, #tpu.memory_space<vmem>>, vector<1x128xf32>
    %cst_14 = arith.constant dense<0.000000e+00> : vector<8x128xf32>
    %15 = tpu.matmul %12, %13, %cst_14 {dimension_numbers = #tpu.dot_dimension_numbers<[1], [0], [0], [1], [0, 0, 1, 1], [], []>} : vector<8x32xf32>, vector<32x128xf32>, vector<8x128xf32> -> vector<8x128xf32>
    %16 = vector.broadcast %14 : vector<1x128xf32> to vector<8x128xf32>
    %17 = arith.addf %15, %16 : vector<8x128xf32>
    %18 = tpu.iota {dimensions = array<i32: 1>} : vector<8x128xi32>
    %c8_i32 = arith.constant 8 : i32
    %19 = vector.broadcast %c8_i32 : i32 to vector<8x128xi32>
    %20 = arith.cmpi slt, %18, %19 : vector<8x128xi32>
    %c40_i32 = arith.constant 40 : i32
    %21 = vector.broadcast %c40_i32 : i32 to vector<8x128xi32>
    %22 = arith.cmpi sge, %18, %21 : vector<8x128xi32>
    %c72_i32 = arith.constant 72 : i32
    %23 = vector.broadcast %c72_i32 : i32 to vector<8x128xi32>
    %24 = arith.cmpi slt, %18, %23 : vector<8x128xi32>
    %25 = arith.andi %22, %24 : vector<8x128xi1>
    %cst_15 = arith.constant -1.000000e+30 : f32
    %26 = vector.broadcast %cst_15 : f32 to vector<8x128xf32>
    %27 = arith.select %20, %17, %26 : vector<8x128xi1>, vector<8x128xf32>
    %cst_16 = arith.constant dense<0xFF800000> : vector<8xf32>
    %28 = vector.multi_reduction <maximumf>, %27, %cst_16 [1] : vector<8x128xf32> to vector<8xf32>
    %29 = vector.shape_cast %28 : vector<8xf32> to vector<8x1xf32>
    %30 = vector.broadcast %29 : vector<8x1xf32> to vector<8x128xf32>
    %31 = arith.subf %17, %30 : vector<8x128xf32>
    %cst_17 = arith.constant -1.000000e+30 : f32
    %32 = vector.broadcast %cst_17 : f32 to vector<8x128xf32>
    %33 = arith.select %25, %17, %32 : vector<8x128xi1>, vector<8x128xf32>
    %34 = arith.select %20, %31, %33 : vector<8x128xi1>, vector<8x128xf32>
    %35 = math.exp %34 : vector<8x128xf32>
    %cst_18 = arith.constant 0.000000e+00 : f32
    %36 = vector.broadcast %cst_18 : f32 to vector<8x128xf32>
    %37 = arith.select %20, %35, %36 : vector<8x128xi1>, vector<8x128xf32>
    %cst_19 = arith.constant dense<0.000000e+00> : vector<8xf32>
    %38 = vector.multi_reduction <add>, %37, %cst_19 [1] : vector<8x128xf32> to vector<8xf32>
    %39 = vector.shape_cast %38 : vector<8xf32> to vector<8x1xf32>
    %40 = vector.broadcast %39 : vector<8x1xf32> to vector<8x128xf32>
    %41 = arith.divf %37, %40 : vector<8x128xf32>
    %cst_20 = arith.constant 9.99999974E-6 : f32
    %cst_21 = arith.constant 1.000000e+00 : f32
    %42 = vector.broadcast %cst_20 : f32 to vector<8x128xf32>
    %43 = arith.maximumf %42, %41 : vector<8x128xf32>
    %44 = vector.broadcast %cst_21 : f32 to vector<8x128xf32>
    %45 = arith.minimumf %44, %43 : vector<8x128xf32>
    %cst_22 = arith.constant 0.000000e+00 : f32
    %46 = vector.broadcast %cst_22 : f32 to vector<8x128xf32>
    %47 = arith.select %20, %45, %46 : vector<8x128xi1>, vector<8x128xf32>
    %cst_23 = arith.constant dense<0.000000e+00> : vector<8xf32>
    %48 = vector.multi_reduction <add>, %47, %cst_23 [1] : vector<8x128xf32> to vector<8xf32>
    %49 = vector.shape_cast %48 : vector<8xf32> to vector<8x1xf32>
    %50 = vector.broadcast %49 : vector<8x1xf32> to vector<8x128xf32>
    %51 = arith.divf %47, %50 : vector<8x128xf32>
    %52 = arith.select %25, %35, %17 : vector<8x128xi1>, vector<8x128xf32>
    %53 = arith.select %20, %51, %52 : vector<8x128xi1>, vector<8x128xf32>
    %c0_24 = arith.constant 0 : index
    %c0_25 = arith.constant 0 : index
    %54 = vector.load %arg8[%c0_24, %c0_25] : memref<8x128xf32, #tpu.memory_space<vmem>>, vector<8x128xf32>
    tpu.vector_store %arg8[%c0_24, %c0_25], %53 {strides = array<i32>} : memref<8x128xf32, #tpu.memory_space<vmem>>, vector<8x128xf32>,
    %c8_i32_26 = arith.constant 8 : i32
    %55 = arith.muli %arg0, %c8_i32_26 : i32
    %56 = tpu.iota {dimensions = array<i32: 0>} : vector<8x128xi32>
    %57 = vector.broadcast %55 : i32 to vector<8x128xi32>
    %58 = arith.addi %57, %56 : vector<8x128xi32>
    %c8_i32_27 = arith.constant 8 : i32
    %59 = vector.broadcast %c8_i32_27 : i32 to vector<8x128xi32>
    %60 = arith.cmpi slt, %58, %59 : vector<8x128xi32>
    %61 = arith.andi %25, %60 : vector<8x128xi1>
    %cst_28 = arith.constant 0.000000e+00 : f32
    %62 = vector.broadcast %cst_28 : f32 to vector<8x128xf32>
    %63 = arith.select %61, %35, %62 : vector<8x128xi1>, vector<8x128xf32>
    %cst_29 = arith.constant dense<0.000000e+00> : vector<128xf32>
    %64 = vector.multi_reduction <add>, %63, %cst_29 [0] : vector<8x128xf32> to vector<128xf32>
    %65 = vector.shape_cast %64 : vector<128xf32> to vector<1x128xf32>
    %66 = vector.shape_cast %65 : vector<1x128xf32> to vector<1x128xf32>
    %67 = vector.broadcast %66 : vector<1x128xf32> to vector<8x128xf32>
    %c0_30 = arith.constant 0 : index
    %c0_31 = arith.constant 0 : index
    %68 = vector.load %arg9[%c0_30, %c0_31] : memref<8x128xf32, #tpu.memory_space<vmem>>, vector<8x128xf32>
    tpu.vector_store %arg9[%c0_30, %c0_31], %67 {strides = array<i32>} : memref<8x128xf32, #tpu.memory_space<vmem>>, vector<8x128xf32>,
    return
  }
  func.func @transform_0(%arg0: i32) -> (i32, i32) {
    %c0_i32 = arith.constant 0 : i32
    %c0_i32_0 = arith.constant 0 : i32
    return %arg0, %c0_i32 : i32, i32
  }
  func.func @transform_1(%arg0: i32) -> (i32, i32) {
    %c0_i32 = arith.constant 0 : i32
    %c0_i32_0 = arith.constant 0 : i32
    %c0_i32_1 = arith.constant 0 : i32
    return %c0_i32, %c0_i32_0 : i32, i32
  }
  func.func @transform_2(%arg0: i32) -> (i32, i32) {
    %c0_i32 = arith.constant 0 : i32
    %c0_i32_0 = arith.constant 0 : i32
    %c0_i32_1 = arith.constant 0 : i32
    return %c0_i32, %c0_i32_0 : i32, i32
  }
  func.func @transform_3(%arg0: i32) -> (i32, i32) {
    %c0_i32 = arith.constant 0 : i32
    %c0_i32_0 = arith.constant 0 : i32
    %c0_i32_1 = arith.constant 0 : i32
    return %c0_i32, %c0_i32_0 : i32, i32
  }
  func.func @transform_4(%arg0: i32) -> (i32, i32) {
    %c0_i32 = arith.constant 0 : i32
    %c0_i32_0 = arith.constant 0 : i32
    %c0_i32_1 = arith.constant 0 : i32
    return %c0_i32, %c0_i32_0 : i32, i32
  }
  func.func @transform_5(%arg0: i32) -> (i32, i32) {
    %c0_i32 = arith.constant 0 : i32
    %c0_i32_0 = arith.constant 0 : i32
    %c0_i32_1 = arith.constant 0 : i32
    return %c0_i32, %c0_i32_0 : i32, i32
  }
  func.func @transform_6(%arg0: i32) -> (i32, i32) {
    %c0_i32 = arith.constant 0 : i32
    %c0_i32_0 = arith.constant 0 : i32
    %c0_i32_1 = arith.constant 0 : i32
    return %c0_i32, %c0_i32_0 : i32, i32
  }
  func.func @transform_7(%arg0: i32) -> (i32, i32) {
    %c0_i32 = arith.constant 0 : i32
    %c0_i32_0 = arith.constant 0 : i32
    return %arg0, %c0_i32 : i32, i32
  }
  func.func @transform_8(%arg0: i32) -> (i32, i32) {
    %c0_i32 = arith.constant 0 : i32
    %c0_i32_0 = arith.constant 0 : i32
    return %arg0, %c0_i32 : i32, i32
  }
}

</mosaic_0001>

<llo_original>
// kernel: mdnn_forward.1
$region0: #{mdnn_forward.1}
  #allocation0 [shape = 'u32[]', space=smem, size = 0x4, offset = 0x4, fixed_abs, tag = 'smem constant byte address 0x4 - core index']
  #allocation1 [shape = 'u32[72,128]{1,0:T(1,128)}', space=vmem, size = 0x9000, scoped, tag = 'internal scratch']
  %s0 = inlined_call_operand.vmem [shape: f32[8,16], index: 0, kind: input, shape index: {}]
  %s1 = inlined_call_operand.vmem [shape: f32[16,32], index: 1, kind: input, shape index: {}]
  %s2 = inlined_call_operand.vmem [shape: f32[1,32], index: 2, kind: input, shape index: {}]
  %s3 = inlined_call_operand.vmem [shape: f32[32,32], index: 3, kind: input, shape index: {}]
  %s4 = inlined_call_operand.vmem [shape: f32[1,32], index: 4, kind: input, shape index: {}]
  %s5 = inlined_call_operand.vmem [shape: f32[32,128], index: 5, kind: input, shape index: {}]
  %s6 = inlined_call_operand.vmem [shape: f32[1,128], index: 6, kind: input, shape index: {}]
  %s7 = inlined_call_operand.vmem [shape: f32[8,128], index: 7, kind: output, shape index: {0}]
  %s8 = inlined_call_operand.vmem [shape: f32[8,128], index: 8, kind: output, shape index: {1}]
  %9 = xla_tuple %s7, %s8
  %s10 = sld [smem:[#allocation0]]
  $region46: #{mdnn_forward.1} parent=0
    _
  %s12 = ssub.s32 1, %s10
  %s13 = scalar_select 0, %s12, %s10
  // Predicated region
  $region2: #{mdnn_forward.1} parent=0 // pred_check
    _
  $region3: #{mdnn_forward.1} parent=0 // pred_check_branch
    %15 = sbr.rel (0) target = $region5
  $region4: #{mdnn_forward.1} parent=0 // pred_region
    _
  $region5: #{mdnn_forward.1} parent=0 // pred_fallthru
    _
  // Predicated region
  $region6: #{mdnn_forward.1} parent=0 // pred_check
    _
  $region7: #{mdnn_forward.1} parent=0 // pred_check_branch
    %17 = sbr.rel (0) target = $region9
  $region8: #{mdnn_forward.1} parent=0 // pred_region
    _
  $region9: #{mdnn_forward.1} parent=0 // pred_fallthru
    _
  // Predicated region
  $region10: #{mdnn_forward.1} parent=0 // pred_check
    _
  $region11: #{mdnn_forward.1} parent=0 // pred_check_branch
    %19 = sbr.rel (0) target = $region13
  $region12: #{mdnn_forward.1} parent=0 // pred_region
    _
  $region13: #{mdnn_forward.1} parent=0 // pred_fallthru
    _
  // Predicated region
  $region14: #{mdnn_forward.1} parent=0 // pred_check
    _
  $region15: #{mdnn_forward.1} parent=0 // pred_check_branch
    %21 = sbr.rel (0) target = $region17
  $region16: #{mdnn_forward.1} parent=0 // pred_region
    _
  $region17: #{mdnn_forward.1} parent=0 // pred_fallthru
    _
  // Predicated region
  $region18: #{mdnn_forward.1} parent=0 // pred_check
    _
  $region19: #{mdnn_forward.1} parent=0 // pred_check_branch
    %23 = sbr.rel (0) target = $region21
  $region20: #{mdnn_forward.1} parent=0 // pred_region
    _
  $region21: #{mdnn_forward.1} parent=0 // pred_fallthru
    _
  // Predicated region
  $region22: #{mdnn_forward.1} parent=0 // pred_check
    _
  $region23: #{mdnn_forward.1} parent=0 // pred_check_branch
    %25 = sbr.rel (0) target = $region25
  $region24: #{mdnn_forward.1} parent=0 // pred_region
    _
  $region25: #{mdnn_forward.1} parent=0 // pred_fallthru
    _
  // Predicated region
  $region26: #{mdnn_forward.1} parent=0 // pred_check
    _
  $region27: #{mdnn_forward.1} parent=0 // pred_check_branch
    %27 = sbr.rel (0) target = $region29
  $region28: #{mdnn_forward.1} parent=0 // pred_region
    _
  $region29: #{mdnn_forward.1} parent=0 // pred_fallthru
    _
  %v28 = vld [vmem:[%s0] sm:$0xff]
  %v29 = vld [vmem:[%s1] sm:$0xff]
  %v30 = vld [vmem:[%s1 + $0x8] sm:$0xff]
  %v31 = vld [vmem:[%s2] sm:$0x1]
  %v33 = vperm.slane %v31, 0
  %vm35 = vcmask 130048
  %v37 = vsel %vm35, %v28, 0
  %39 = vmatpush.msra.mxu0 0.0
  %40 = vmatpush.msra.mxu0 0.0
  %41 = vmatpush.msra.mxu0 0.0
  %42 = vmatpush.msra.mxu0 0.0
  %43 = vmatpush.msra.mxu0 0.0
  %44 = vmatpush.msra.mxu0 0.0
  %45 = vmatpush.msra.mxu0 0.0
  %46 = vmatpush.msra.mxu0 0.0
  %47 = vmatpush.msra.mxu0 0.0
  %48 = vmatpush.msra.mxu0 0.0
  %49 = vmatpush.msra.mxu0 0.0
  %50 = vmatpush.msra.mxu0 0.0
  %51 = vmatpush.msra.mxu0 0.0
  %52 = vmatpush.msra.mxu0 0.0
  %53 = vmatpush.msra.mxu0 %v30
  %54 = vmatpush.msra.mxu0 %v29
  %55 = vmatmul.f32.gmra.mxu0 %v37
  %v56 = vpop.f32.mrf.mxu0
  %v57 = vadd.f32 %v33, %v56
  %58 = vdwg.mxu0
  %v59 = vtanh.pop %v57
  %v60 = vld [vmem:[%s3] sm:$0xff]
  %v61 = vld [vmem:[%s3 + $0x8] sm:$0xff]
  %v62 = vld [vmem:[%s3 + $0x10] sm:$0xff]
  %v63 = vld [vmem:[%s3 + $0x18] sm:$0xff]
  %v64 = vld [vmem:[%s4] sm:$0x1]
  %v66 = vperm.slane %v64, 0
  %vm68 = vcmask 261120
  %v70 = vsel %vm68, %v59, 0
  %72 = vmatpush.msra.mxu0 0.0
  %73 = vmatpush.msra.mxu0 0.0
  %74 = vmatpush.msra.mxu0 0.0
  %75 = vmatpush.msra.mxu0 0.0
  %76 = vmatpush.msra.mxu0 0.0
  %77 = vmatpush.msra.mxu0 0.0
  %78 = vmatpush.msra.mxu0 0.0
  %79 = vmatpush.msra.mxu0 0.0
  %80 = vmatpush.msra.mxu0 0.0
  %81 = vmatpush.msra.mxu0 0.0
  %82 = vmatpush.msra.mxu0 0.0
  %83 = vmatpush.msra.mxu0 0.0
  %84 = vmatpush.msra.mxu0 %v63
  %85 = vmatpush.msra.mxu0 %v62
  %86 = vmatpush.msra.mxu0 %v61
  %87 = vmatpush.msra.mxu0 %v60
  %88 = vmatmul.f32.gmra.mxu0 %v70
  %v89 = vpop.f32.mrf.mxu0
  %v90 = vadd.f32 %v66, %v89
  %91 = vdwg.mxu0
  %v92 = vtanh.pop %v90
  %v93 = vld [vmem:[%s5] sm:$0xff]
  %v94 = vld [vmem:[%s5 + $0x8] sm:$0xff]
  %v95 = vld [vmem:[%s5 + $0x10] sm:$0xff]
  %v96 = vld [vmem:[%s5 + $0x18] sm:$0xff]
  %v97 = vld [vmem:[%s6] sm:$0x1]
  %v99 = vperm.slane %v97, 0
  %v102 = vsel %vm68, %v92, 0
  %104 = vmatpush.msra.mxu0 0.0
  %105 = vmatpush.msra.mxu0 0.0
  %106 = vmatpush.msra.mxu0 0.0
  %107 = vmatpush.msra.mxu0 0.0
  %108 = vmatpush.msra.mxu0 0.0
  %109 = vmatpush.msra.mxu0 0.0
  %110 = vmatpush.msra.mxu0 0.0
  %111 = vmatpush.msra.mxu0 0.0
  %112 = vmatpush.msra.mxu0 0.0
  %113 = vmatpush.msra.mxu0 0.0
  %114 = vmatpush.msra.mxu0 0.0
  %115 = vmatpush.msra.mxu0 0.0
  %116 = vmatpush.msra.mxu0 %v96
  %117 = vmatpush.msra.mxu0 %v95
  %118 = vmatpush.msra.mxu0 %v94
  %119 = vmatpush.msra.mxu0 %v93
  %120 = vmatmul.f32.gmra.mxu0 %v102
  %v121 = vpop.f32.mrf.mxu0
  %v122 = vadd.f32 %v99, %v121
  %123 = vdwg.mxu0
  %v124 = vlaneseq
  %v125 = vand.u32 %v124, 127
  %vm126 = vcmp.lt.s32.totalorder %v125, 8
  %vm127 = vcmp.ge.s32.totalorder %v125, 40
  %vm128 = vcmp.lt.s32.totalorder %v125, 72
  %vm129 = vmand %vm127, %vm128
  %v130 = vsel %vm126, %v122, -1e+30
  %131 = vmax.xlane.f32.xlu0 %v130
  %v132 = vpop.xlane.xlu0 %131
  %v133 = vsub.f32 %v122, %v132
  %v134 = vsel %vm129, %v122, -1e+30
  %v135 = vsel %vm126, %v133, %v134
  %v136 = vmul.f32 %v135, 1.442695
  %v137 = vpow.pop %v136
  %v138 = vsel %vm126, %v137, 0.0
  %139 = vadd.xlane.f32.xlu0 %v138
  %v140 = vpop.xlane.xlu0 %139
  %v141 = vrcp.pop %v140
  %v142 = vmul.f32 %v140, %v141
  %v143 = vsub.f32 1.0, %v142
  %v144 = vmul.f32 %v141, %v143
  %v145 = vadd.f32 %v141, %v144
  %vm146 = vweird.f32 %v140
  %vm147 = vweird.f32 %v141
  %vm148 = vmor %vm146, %vm147
  %v149 = vsel %vm148, %v141, %v145
  %v150 = vand.u32 2147483647, %v140
  %vm151 = vcmp.eq.f32.partialorder %v150, 8.507059e+37
  %v152 = vand.u32 %v140, 2147483648
  %v153 = vor.u32 1.1754944e-38, %v152
  %v154 = vsel %vm151, %v153, %v149
  %v155 = vmul.f32 %v138, %v154
  %v156 = vmax.f32 %v155, 1e-05
  %v157 = vmin.f32 %v156, 1.0
  %v158 = vsel %vm126, %v157, 0.0
  %159 = vadd.xlane.f32.xlu0 %v158
  %v160 = vpop.xlane.xlu0 %159
  %v161 = vrcp.pop %v160
  %v162 = vmul.f32 %v160, %v161
  %v163 = vsub.f32 1.0, %v162
  %v164 = vmul.f32 %v161, %v163
  %v165 = vadd.f32 %v161, %v164
  %vm166 = vweird.f32 %v160
  %vm167 = vweird.f32 %v161
  %vm168 = vmor %vm166, %vm167
  %v169 = vsel %vm168, %v161, %v165
  %v170 = vand.u32 2147483647, %v160
  %vm171 = vcmp.eq.f32.partialorder %v170, 8.507059e+37
  %v172 = vand.u32 %v160, 2147483648
  %v173 = vor.u32 1.1754944e-38, %v172
  %v174 = vsel %vm171, %v173, %v169
  %v175 = vmul.f32 %v158, %v174
  %v176 = vsel %vm129, %v137, %v122
  %v177 = vsel %vm126, %v175, %v176
  %178 = vst [vmem:[%s7] sm:$0xff] %v177
  %s179 = smul.u32 0, 8
  %v180 = vlaneseq
  %v181 = vshrl.u32 %v180, 7
  %v182 = vstv %s179
  %v183 = vadd.s32 %v182, %v181
  %vm184 = vcmp.lt.s32.totalorder %v183, 8
  %vm185 = vmand %vm129, %vm184
  %v186 = vsel %vm185, %v137, 0.0
  %v187 = vrot.slane %v186, 4
  %v188 = vadd.f32 %v186, %v187
  %v189 = vrot.slane %v188, 2
  %v190 = vadd.f32 %v188, %v189
  %v191 = vrot.slane %v190, 1
  %v192 = vadd.f32 %v190, %v191
  %193 = vst [vmem:[%s8] sm:$0xff] %v192
  // Predicated region
  $region30: #{mdnn_forward.1} parent=0 // pred_check
    _
  $region31: #{mdnn_forward.1} parent=0 // pred_check_branch
    %195 = sbr.rel (0) target = $region33
  $region32: #{mdnn_forward.1} parent=0 // pred_region
    _
  $region33: #{mdnn_forward.1} parent=0 // pred_fallthru
    _
  // Predicated region
  $region34: #{mdnn_forward.1} parent=0 // pred_check
    _
  $region35: #{mdnn_forward.1} parent=0 // pred_check_branch
    %197 = sbr.rel (0) target = $region37
  $region36: #{mdnn_forward.1} parent=0 // pred_region
    _
  $region37: #{mdnn_forward.1} parent=0 // pred_fallthru
    _
  // Predicated region
  $region38: #{mdnn_forward.1} parent=0 // pred_check
    _
  $region39: #{mdnn_forward.1} parent=0 // pred_check_branch
    %199 = sbr.rel (0) target = $region41
  $region40: #{mdnn_forward.1} parent=0 // pred_region
    _
  $region41: #{mdnn_forward.1} parent=0 // pred_fallthru
    _
  // Predicated region
  $region42: #{mdnn_forward.1} parent=0 // pred_check
    _
  $region43: #{mdnn_forward.1} parent=0 // pred_check_branch
    %201 = sbr.rel (0) target = $region45
  $region44: #{mdnn_forward.1} parent=0 // pred_region
    _
  $region45: #{mdnn_forward.1} parent=0 // pred_fallthru
    _

</llo_original>
